<compile_context>
chip_gen: v7x
topology: tpu7x:2x2x1
jax: 0.10.0
libtpu: 0.0.40
codegen_flags: <defaults>
</compile_context>

<pallas_src>
import jax
import jax.numpy as jnp
from jax.experimental import pallas as pl
from jax.experimental.pallas import tpu as pltpu


def _cdiv(a, b):
    return -(-a // b)


# ----------------------------- Pallas kernel --------------------------------
def _value_head_kernel(h_ref, m_ref, w_ref, b_ref, out_ref):
    """out[b, t] = mask[b, t] * <h[b, t, :], w> + bias for one sequence tile.

    h_ref   : VMEM [B, T, H]  bf16/f32  hidden-state tile (window over seq)
    m_ref   : VMEM [B, T]     f32       attention-mask tile (lane-dense)
    w_ref   : VMEM [1, H]     f32       nn.Linear(H, 1).weight (resident)
    b_ref   : SMEM [1]        f32       nn.Linear(H, 1).bias
    out_ref : VMEM [B, T]     f32       per-position values (lane-dense)
    """
    # Upcast per tile: v5e has no bf16 VPU datapath; accumulate in f32.
    h = h_ref[...].astype(jnp.float32)                     # [B, T, H]
    # Weight is resident ([1, H], constant index_map).  Its 1->8 sublane splat
    # is a single vreg op per grid step, negligible next to the B*T*H/1024
    # vreg multiplies below (and the kernel is HBM-bound anyway); a stride-0
    # sublane slice could hoist it entirely if profiling shows VPU pressure.
    w = w_ref[...]                                         # [1, H]
    # N=1 contraction on the VPU (multiply) + XLU (lane-axis reduce); an MXU
    # matmul with a single output column would waste the systolic array.
    dots = jnp.sum(h * w, axis=-1)                         # [B, T] f32
    # Mask is a per-position 0/1 scalar: mask*(h.w) == (mask*h).w, so fusing
    # it here is exact.  Store is lane-dense (T on the lane axis).
    out_ref[...] = dots * m_ref[...] + b_ref[0]


# --------------------------- tiling heuristics -------------------------------
def _choose_seq_tile(batch, seq, num_actions, hidden, itemsize, budget_bytes):
    """Sequence-axis tile: either the full sequence (single block, exempt from
    alignment rules) or a multiple of 128 so the [B, tile, H] hidden block is
    sublane-aligned and the [B, tile] mask/output blocks are lane-dense."""
    row_bytes = batch * hidden * itemsize            # bytes per sequence position
    # Largest multiple-of-128 tile whose hidden block fits the byte budget.
    fit = max(128, (budget_bytes // row_bytes) // 128 * 128)
    # Don't read much past the action window, and aim for >=2 grid steps over
    # it when it is large enough (v7x: "parallel" axis shards over 2 TCs).
    if num_actions > 128:
        want = _cdiv(_cdiv(num_actions, 2), 128) * 128
    else:
        want = 128
    tile = min(fit, want)
    if tile >= seq:
        return seq                                    # one block over the whole sequence
    return tile


# ------------------------------- wrapper -------------------------------------
def value_head_values(hidden_state, attention_mask, w, b, num_actions,
                      *, tile_budget_bytes=8 * 1024 * 1024):
    """hidden_state [B,S,H] (+ mask [B,S]) -> values [B, num_actions] (f32).

    Only the trailing-window blocks selected by the index_map are DMA'd
    HBM->VMEM; there is no wrapper-side copy of the hidden states.
    """
    B, S, H = hidden_state.shape
    A = int(num_actions)
    if not (0 < A <= S):
        raise ValueError(f"num_actions={A} must be in (0, {S}]")

    itemsize = jnp.dtype(hidden_state.dtype).itemsize
    a_tile = _choose_seq_tile(B, S, A, H, itemsize, tile_budget_bytes)
    # First tile-aligned block that still covers sequence position S - A.
    start_blk = (S - A) // a_tile
    n_tiles = _cdiv(S - start_blk * a_tile, a_tile)   # last block may overhang S
    offset = (S - A) - start_blk * a_tile             # window start inside the output

    # VMEM sizing: double-buffered hidden tile + mask/out tiles + resident w.
    tile_in = B * a_tile * H * itemsize
    tile_aux = 2 * B * a_tile * 4                     # f32 mask + f32 out tiles
    vmem_need = 2 * (tile_in + tile_aux) + H * 4 + 4096
    if vmem_need > 56 * 1024 * 1024:                  # headroom inside v7x's 64 MiB
        raise ValueError(
            f"value-head tile needs ~{vmem_need >> 20} MiB of VMEM; lower "
            f"tile_budget_bytes (={tile_budget_bytes}) for B={B}, H={H}.")
    vmem_limit = max(32 * 1024 * 1024, vmem_need + (4 << 20))

    mask_f32 = attention_mask.astype(jnp.float32)     # [B, S], tiny
    w_f32 = jnp.asarray(w, jnp.float32).reshape(1, H)
    b_f32 = jnp.asarray(b, jnp.float32).reshape(1)

    out = pl.pallas_call(
        _value_head_kernel,
        out_shape=jax.ShapeDtypeStruct((B, n_tiles * a_tile), jnp.float32),
        grid_spec=pltpu.PrefetchScalarGridSpec(
            num_scalar_prefetch=0,
            grid=(n_tiles,),
            in_specs=[
                # Hidden states: last-A window indexed directly in the
                # index_map (no wrapper slice/pad).  Add
                # pipeline_mode=pl.Buffered(3) only if profiling shows exposed
                # DMA at small H — sweep, don't assume.
                pl.BlockSpec((B, a_tile, H), lambda j: (0, start_blk + j, 0)),
                # Attention mask, lane-dense [B, a_tile] tiles.
                pl.BlockSpec((B, a_tile), lambda j: (0, start_blk + j)),
                # Value-head weight: resident across all grid steps.
                pl.BlockSpec((1, H), lambda j: (0, 0)),
                # Bias scalar in SMEM.
                pl.BlockSpec(memory_space=pltpu.MemorySpace.SMEM),
            ],
            out_specs=pl.BlockSpec((B, a_tile), lambda j: (0, j)),
        ),
        compiler_params=pltpu.CompilerParams(
            dimension_semantics=("parallel",),  # shards seq tiles over v7x's 2 TCs
            vmem_limit_bytes=vmem_limit,        # v5e default scoped limit is 16 MiB
        ),
    )(hidden_state, mask_f32, w_f32, b_f32)

    # Tiny [B, n_tiles*a_tile] f32 slab; exact-window slice here is free.
    return out[:, offset:offset + A]


# ----------------------- synthetic "base model" stub -------------------------
def base_model_stub(input_ids, embed_table):
    """Deterministic stand-in for base_model(...).last_hidden_state.

    Returns unmasked hidden states in bf16 (the attention-mask multiply is
    fused into the value-head kernel on the sliced window only)."""
    return embed_table[input_ids].astype(jnp.bfloat16)          # [B, S, H] bf16


def critic_forward(input_ids, attention_mask, num_actions, params):
    hidden_state = base_model_stub(input_ids, params["embed"])
    values = value_head_values(
        hidden_state, attention_mask, params["vh_w"], params["vh_b"], num_actions
    )
    return values  # [B, num_actions]


# ---------------------------------- main -------------------------------------
if __name__ == "__main__":
    B, S, H = 2, 8, 32
    VOCAB = 16
    NUM_ACTIONS = 4

    key = jax.random.PRNGKey(0)
    k_ids, k_emb, k_w, k_b = jax.random.split(key, 4)

    input_ids = jax.random.randint(k_ids, (B, S), 0, VOCAB, dtype=jnp.int32)
    # Zero one mask position inside the action window to exercise the fusion.
    attention_mask = jnp.ones((B, S), dtype=jnp.int32).at[0, S - 2].set(0)

    params = {
        # synthetic base-model embedding table (deterministic init)
        "embed": jax.random.normal(k_emb, (VOCAB, H), dtype=jnp.float32) * 0.1,
        # nn.Linear(hidden_size=H, out_features=1): weight [1, H], bias [1]
        "vh_w": jax.random.normal(k_w, (1, H), dtype=jnp.float32) * 0.05,
        "vh_b": jax.random.normal(k_b, (1,), dtype=jnp.float32) * 0.05,
    }

    values = critic_forward(input_ids, attention_mask, NUM_ACTIONS, params)
    values = jax.block_until_ready(values)

    # pure-JAX reference (same bf16 carrier for the hidden states, f32 math)
    hidden_ref = params["embed"][input_ids].astype(jnp.bfloat16).astype(jnp.float32)
    dots_ref = jnp.einsum("bsh,oh->bs", hidden_ref, params["vh_w"])
    ref = (dots_ref * attention_mask.astype(jnp.float32)
           + params["vh_b"][0])[:, -NUM_ACTIONS:]

    assert values.shape == (B, NUM_ACTIONS)
    assert jnp.allclose(values, ref, atol=1e-5, rtol=1e-5)

    print("KERNEL_OK")
</pallas_src>

<mosaic_0001>
module attributes {stable_mosaic.version = 11 : i64} {
  func.func @_value_head_kernel(%arg0: i32, %arg1: memref<2x8x32xbf16, #tpu.memory_space<vmem>>, %arg2: memref<2x8xf32, #tpu.memory_space<vmem>>, %arg3: memref<1x32xf32, #tpu.memory_space<vmem>>, %arg4: memref<1xf32, #tpu.memory_space<smem>>, %arg5: memref<2x8xf32, #tpu.memory_space<vmem>>) attributes {dimension_semantics = [#tpu.dimension_semantics<parallel>], iteration_bounds = array<i64: 1>, scalar_prefetch = 0 : i64, scratch_operands = 0 : i64, tpu.core_type = #tpu.core_type<tc>, window_params = [{transform_indices = @transform_0, window_bounds = array<i64: 2, 8, 32>}, {transform_indices = @transform_1, window_bounds = array<i64: 2, 8>}, {pipeline_mode = #tpu.pipeline_mode<synchronous>, transform_indices = @transform_2, window_bounds = array<i64: 1, 32>}, {transform_indices = @transform_3, window_bounds = array<i64: 1>}, {transform_indices = @transform_4, window_bounds = array<i64: 2, 8>}]} {
    %c0 = arith.constant 0 : index
    %c0_0 = arith.constant 0 : index
    %c0_1 = arith.constant 0 : index
    %0 = vector.load %arg1[%c0, %c0_0, %c0_1] : memref<2x8x32xbf16, #tpu.memory_space<vmem>>, vector<2x8x32xbf16>
    %1 = arith.extf %0 : vector<2x8x32xbf16> to vector<2x8x32xf32>
    %c0_2 = arith.constant 0 : index
    %c0_3 = arith.constant 0 : index
    %2 = vector.load %arg3[%c0_2, %c0_3] : memref<1x32xf32, #tpu.memory_space<vmem>>, vector<1x32xf32>
    %3 = vector.shape_cast %2 : vector<1x32xf32> to vector<1x1x32xf32>
    %4 = vector.broadcast %3 : vector<1x1x32xf32> to vector<2x8x32xf32>
    %5 = arith.mulf %1, %4 : vector<2x8x32xf32>
    %cst = arith.constant dense<0.000000e+00> : vector<2x8xf32>
    %6 = vector.multi_reduction <add>, %5, %cst [2] : vector<2x8x32xf32> to vector<2x8xf32>
    %c0_4 = arith.constant 0 : index
    %c0_5 = arith.constant 0 : index
    %7 = vector.load %arg2[%c0_4, %c0_5] : memref<2x8xf32, #tpu.memory_space<vmem>>, vector<2x8xf32>
    %8 = arith.mulf %6, %7 : vector<2x8xf32>
    %c0_6 = arith.constant 0 : index
    %9 = memref.load %arg4[%c0_6] : memref<1xf32, #tpu.memory_space<smem>>
    %10 = vector.broadcast %9 : f32 to vector<2x8xf32>
    %11 = arith.addf %8, %10 : vector<2x8xf32>
    %c0_7 = arith.constant 0 : index
    %c0_8 = arith.constant 0 : index
    %12 = vector.load %arg5[%c0_7, %c0_8] : memref<2x8xf32, #tpu.memory_space<vmem>>, vector<2x8xf32>
    tpu.vector_store %arg5[%c0_7, %c0_8], %11 {strides = array<i32>} : memref<2x8xf32, #tpu.memory_space<vmem>>, vector<2x8xf32>,
    return
  }
  func.func @transform_0(%arg0: i32) -> (i32, i32, i32) {
    %c0_i32 = arith.constant 0 : i32
    %0 = arith.addi %c0_i32, %arg0 : i32
    %c0_i32_0 = arith.constant 0 : i32
    %c0_i32_1 = arith.constant 0 : i32
    %c0_i32_2 = arith.constant 0 : i32
    return %c0_i32_0, %0, %c0_i32_1 : i32, i32, i32
  }
  func.func @transform_1(%arg0: i32) -> (i32, i32) {
    %c0_i32 = arith.constant 0 : i32
    %0 = arith.addi %c0_i32, %arg0 : i32
    %c0_i32_0 = arith.constant 0 : i32
    %c0_i32_1 = arith.constant 0 : i32
    return %c0_i32_0, %0 : i32, i32
  }
  func.func @transform_2(%arg0: i32) -> (i32, i32) {
    %c0_i32 = arith.constant 0 : i32
    %c0_i32_0 = arith.constant 0 : i32
    %c0_i32_1 = arith.constant 0 : i32
    return %c0_i32, %c0_i32_0 : i32, i32
  }
  func.func @transform_3(%arg0: i32) -> i32 {
    %c0_i32 = arith.constant 0 : i32
    %c0_i32_0 = arith.constant 0 : i32
    return %c0_i32 : i32
  }
  func.func @transform_4(%arg0: i32) -> (i32, i32) {
    %c0_i32 = arith.constant 0 : i32
    %c0_i32_0 = arith.constant 0 : i32
    return %c0_i32, %arg0 : i32, i32
  }
}

</mosaic_0001>

<llo_original>
// kernel: tpu_custom_call.1
$region0: #{tpu_custom_call.1}
  #allocation0 [shape = 'u32[]', space=smem, size = 0x4, offset = 0x4, fixed_abs, tag = 'smem constant byte address 0x4 - core index']
  #allocation1 [shape = 'u32[144,128]{1,0:T(1,128)}', space=vmem, size = 0x12000, scoped, tag = 'internal scratch']
  #allocation2 [shape = 'f32[1]{0:T(128)S(6)}', space=smem, size = 0x200, scoped, tag = 'scoped memory for tpu_custom_call.1']
  %s0 = inlined_call_operand.hbm [shape: bf16[2,8,32], index: 0, kind: input, shape index: {}]
  %s1 = inlined_call_operand.vmem [shape: f32[2,8], index: 1, kind: input, shape index: {}]
  %s2 = inlined_call_operand.vmem [shape: f32[1,32], index: 2, kind: input, shape index: {}]
  %s3 = inlined_call_operand.<no memory space> [shape: f32[1], index: 3, kind: input, shape index: {}]
  %s4 = inlined_call_operand.hbm [shape: f32[2,8], index: 4, kind: output, shape index: {}]
  %s5 = sld [smem:[#allocation0]]
  $region30: #{tpu_custom_call.1} parent=0
    _
  %s7 = ssub.s32 1, %s5
  %s8 = scalar_select 0, %s7, %s5
  %9 = sst [smem:[#allocation2]] %s3
  $region1: #{tpu_custom_call.1} parent=0
    #allocation3 [shape = 'u8[4096]{0}', space=vmem, size = 0x1000, scoped, tag = 'input window, operand 0, single buffered']
    #allocation4 [shape = 's32[1]{0}', space=sflag, size = 0x4, scoped, tag = 'scoped memory for tpu_custom_call.1']
    #allocation5 [shape = 's32[1]{0}', space=sflag, size = 0x4, scoped, tag = 'scoped memory for tpu_custom_call.1']
    #allocation6 [shape = 'u8[1024]{0}', space=vmem, size = 0x400, scoped, tag = 'output window, operand 0, single buffered']
    %10 = vsyncpa [#allocation4], 0
    %11 = vsyncpa [#allocation5], 0
    // Predicated region
    $region2: #{tpu_custom_call.1} parent=1 // pred_check
      _
    $region3: #{tpu_custom_call.1} parent=1 // pred_check_branch
      %13 = sbr.rel (0) target = $region5
    $region4: #{tpu_custom_call.1} parent=1 // pred_region
      %s15 = ssub.s32 128, 128
      %16 = vsyncadd [#allocation4], %s15
      %s17 = sshll.u32 [#allocation3], 4
      %s18 = int_to_ptr.vmem [resolvable:$true] %s17
      %23 = dma.hbm_to_vmem [thread:$0]  %s0, 128, %s18, [#allocation4], 64, 64, 4
    $region5: #{tpu_custom_call.1} parent=1 // pred_fallthru
      _
    // Predicated region
    $region6: #{tpu_custom_call.1} parent=1 // pred_check
      _
    $region7: #{tpu_custom_call.1} parent=1 // pred_check_branch
      %25 = sbr.rel (0) target = $region9
    $region8: #{tpu_custom_call.1} parent=1 // pred_region
      _
    $region9: #{tpu_custom_call.1} parent=1 // pred_fallthru
      _
    // Predicated region
    $region10: #{tpu_custom_call.1} parent=1 // pred_check
      _
    $region11: #{tpu_custom_call.1} parent=1 // pred_check_branch
      %27 = sbr.rel (0) target = $region13
    $region12: #{tpu_custom_call.1} parent=1 // pred_region
      _
    $region13: #{tpu_custom_call.1} parent=1 // pred_fallthru
      _
    // Predicated region
    $region14: #{tpu_custom_call.1} parent=1 // pred_check
      _
    $region15: #{tpu_custom_call.1} parent=1 // pred_check_branch
      %29 = sbr.rel (0) target = $region17
    $region16: #{tpu_custom_call.1} parent=1 // pred_region
      _
    $region17: #{tpu_custom_call.1} parent=1 // pred_fallthru
      _
    // Predicated region
    $region18: #{tpu_custom_call.1} parent=1 // pred_check
      _
    $region19: #{tpu_custom_call.1} parent=1 // pred_check_branch
      %31 = sbr.rel (0) target = $region21
    $region20: #{tpu_custom_call.1} parent=1 // pred_region
      %32 = dma.done [#allocation4], 128
    $region21: #{tpu_custom_call.1} parent=1 // pred_fallthru
      _
    %v33 = vld [vmem:[#allocation3] sm:$0xf]
    %v34 = vld [vmem:[#allocation3 + $0x4] sm:$0xf]
    %v35 = vunpack.c.l.bf16 %v33
    %v36 = vunpack.c.l.bf16 %v34
    %v37 = vld [vmem:[%s2] sm:$0x1]
    %v39 = vlaneseq
    %v40 = vshrl.u32 %v39, 7
    %v41 = vsub.s32 0, %v40
    %v42 = vrot.slane %v37, %v41
    %v44 = vmul.f32 %v35, %v42
    %v45 = vmul.f32 %v36, %v42
    %vm46 = vcmask 261120
    %v47 = vsel %vm46, %v44, 0.0
    %48 = vadd.xlane.f32.xlu0 %v47
    %v49 = vpop.xlane.xlu0 %48
    %v50 = vsel %vm46, %v45, 0.0
    %51 = vadd.xlane.f32.xlu0 %v50
    %v52 = vpop.xlane.xlu0 %51
    %v53 = vld [vmem:[%s1] sm:$0x3]
    %v55 = vlaneseq
    %v56 = vshrl.u32 %v55, 7
    %v57 = vsub.s32 0, %v56
    %v58 = vrot.slane %v53, %v57
    %60 = vbcast.lane.b32.xlu0 %v58, 256
    %v61 = vpop.permute.xlu0 %60
    %v62 = vlaneseq
    %v63 = vshrl.u32 %v62, 7
    %v64 = vsub.s32 1, %v63
    %v65 = vrot.slane %v53, %v64
    %67 = vbcast.lane.b32.xlu0 %v65, 256
    %v68 = vpop.permute.xlu0 %67
    %v71 = vmul.f32 %v49, %v61
    %v72 = vmul.f32 %v52, %v68
    %s73 = sld [smem:[#allocation2]]
    %v74 = vstv %s73
    %v75 = vadd.f32 %v71, %v74
    %v76 = vadd.f32 %v72, %v74
    %79 = vset.pattern.permute.xlu0 0
    %80 = vperm.xlu0 %79, %v75
    %v81 = vpop.permute.xlu0 %80
    %82 = vset.pattern.permute.xlu0 0
    %83 = vperm.xlu0 %82, %v76
    %v84 = vpop.permute.xlu0 %83
    %v85 = vlaneseq
    %v86 = vand.u32 %v85, 127
    %v87 = vlaneseq
    %v88 = vshrl.u32 %v87, 7
    %v89 = vsub.s32 %v86, %v88
    %v90 = vrot.slane %v81, %v89
    %v91 = vlaneseq
    %v92 = vshrl.u32 %v91, 7
    %v93 = vsub.s32 %v86, %v92
    %v94 = vrot.slane %v84, %v93
    %vm95 = vcmask 1041409
    %v96 = vsel %vm95, %v94, %v90
    %vm98 = vcmask 58368
    %99 = vst.msk [vmem:[#allocation6] sm:$0x3] %vm98, %v96
    // Predicated region
    $region22: #{tpu_custom_call.1} parent=1 // pred_check
      _
    $region23: #{tpu_custom_call.1} parent=1 // pred_check_branch
      %101 = sbr.rel (0) target = $region25
    $region24: #{tpu_custom_call.1} parent=1 // pred_region
      %s103 = ssub.s32 32, 32
      %104 = vsyncadd [#allocation5], %s103
      %s106 = sshll.u32 [#allocation6], 4
      %s107 = int_to_ptr.vmem [resolvable:$true] %s106
      %109 = dma.vmem_to_hbm [thread:$0]  %s107, 32, %s4, [#allocation5]
    $region25: #{tpu_custom_call.1} parent=1 // pred_fallthru
      _
    // Predicated region
    $region26: #{tpu_custom_call.1} parent=1 // pred_check
      _
    $region27: #{tpu_custom_call.1} parent=1 // pred_check_branch
      %111 = sbr.rel (0) target = $region29
    $region28: #{tpu_custom_call.1} parent=1 // pred_region
      %112 = dma.done [#allocation5], 32
    $region29: #{tpu_custom_call.1} parent=1 // pred_fallthru
      _
    %113 = vsyncpa [#allocation4], 1
    %114 = vsyncpa [#allocation5], 1

</llo_original>
